<compile_context>
chip_gen: v7x
topology: tpu7x:2x2x1
jax: 0.10.0
libtpu: 0.0.40
codegen_flags: <defaults>
</compile_context>

<pallas_src>
import jax
import jax.numpy as jnp
from jax.experimental import pallas as pl
from jax.experimental.pallas import tpu as pltpu

_PACK = 128                     # packed output width (lane-dense)
_X1 = (0, 64)                   # column ranges inside the packed slab
_X2 = (64, 96)
_X3 = (96, 112)
_OUT = (112, 113)


def _mlp_packed_kernel(x_ref,
                       w1_ref, b1_ref,
                       w2_ref, b2_ref,
                       w3_ref, b3_ref,
                       w4_ref, b4_ref,
                       out_ref):
    """One batch tile fully in VMEM.

    Weights are pre-padded so each layer reads its input columns and writes its
    output columns of the 128-wide packed activation; padded regions stay zero
    (relu(0) == 0), so accumulating with `+` composes the packed slab.
    """
    x = x_ref[...]                                             # (TM, 8)

    # fc1: [x1 | 0...]
    a = jnp.maximum(
        jnp.dot(x, w1_ref[...], preferred_element_type=jnp.float32) + b1_ref[...],
        0.0)
    # fc2: + [0 | x2 | 0...]   (W2p only reads rows 0:64 = x1 columns)
    a = a + jnp.maximum(
        jnp.dot(a, w2_ref[...], preferred_element_type=jnp.float32) + b2_ref[...],
        0.0)
    # fc3: + [0 | 0 | x3 | 0...]
    a = a + jnp.maximum(
        jnp.dot(a, w3_ref[...], preferred_element_type=jnp.float32) + b3_ref[...],
        0.0)
    # fc4 (no ReLU): + [0 ... | out | 0]
    a = a + jnp.dot(a, w4_ref[...], preferred_element_type=jnp.float32) + b4_ref[...]

    out_ref[...] = a                                           # single unmasked (TM,128) store


def _round_up(n, m):
    return (n + m - 1) // m * m


def _pack_params(params):
    """Zero-pad weights/biases so each layer places its output in its packed columns."""
    w1, b1 = params["w1"], params["b1"]        # (8,64),  (1,64)
    w2, b2 = params["w2"], params["b2"]        # (64,32), (1,32)
    w3, b3 = params["w3"], params["b3"]        # (32,16), (1,16)
    w4, b4 = params["w4"], params["b4"]        # (16,1),  (1,1)

    W1 = jnp.zeros((8, _PACK), jnp.float32).at[:, _X1[0]:_X1[1]].set(w1)
    B1 = jnp.zeros((1, _PACK), jnp.float32).at[:, _X1[0]:_X1[1]].set(b1)
    W2 = jnp.zeros((_PACK, _PACK), jnp.float32).at[_X1[0]:_X1[1], _X2[0]:_X2[1]].set(w2)
    B2 = jnp.zeros((1, _PACK), jnp.float32).at[:, _X2[0]:_X2[1]].set(b2)
    W3 = jnp.zeros((_PACK, _PACK), jnp.float32).at[_X2[0]:_X2[1], _X3[0]:_X3[1]].set(w3)
    B3 = jnp.zeros((1, _PACK), jnp.float32).at[:, _X3[0]:_X3[1]].set(b3)
    W4 = jnp.zeros((_PACK, _PACK), jnp.float32).at[_X3[0]:_X3[1], _OUT[0]:_OUT[1]].set(w4)
    B4 = jnp.zeros((1, _PACK), jnp.float32).at[:, _OUT[0]:_OUT[1]].set(b4)
    return W1, B1, W2, B2, W3, B3, W4, B4


def mainnet_forward(x, params, *, block_b=2048):
    """x: (B, 8) float32.  Returns (out, [x1, x2, x3]) matching MainNet.forward."""
    B = x.shape[0]
    W1, B1, W2, B2, W3, B3, W4, B4 = _pack_params(params)

    # Batch tile: multiple of 8 (sublane), capped at block_b; pad B to a whole
    # number of tiles (padded rows discarded after the call).
    tm = min(block_b, _round_up(B, 8))
    b_pad = _round_up(B, tm)
    xp = x if b_pad == B else jnp.pad(x, ((0, b_pad - B), (0, 0)))

    const = lambda i: (0, 0)            # weights/biases: same block every step -> fetched once

    packed = pl.pallas_call(
        _mlp_packed_kernel,
        out_shape=jax.ShapeDtypeStruct((b_pad, _PACK), jnp.float32),
        grid=(b_pad // tm,),
        in_specs=[
            pl.BlockSpec((tm, 8), lambda i: (i, 0)),
            pl.BlockSpec((8, _PACK), const), pl.BlockSpec((1, _PACK), const),
            pl.BlockSpec((_PACK, _PACK), const), pl.BlockSpec((1, _PACK), const),
            pl.BlockSpec((_PACK, _PACK), const), pl.BlockSpec((1, _PACK), const),
            pl.BlockSpec((_PACK, _PACK), const), pl.BlockSpec((1, _PACK), const),
        ],
        out_specs=pl.BlockSpec((tm, _PACK), lambda i: (i, 0)),
        compiler_params=pltpu.CompilerParams(
            dimension_semantics=("parallel",)),   # ~2x on v7x (2 TCs), no-op on v5e/v6e
    )(xp, W1, B1, W2, B2, W3, B3, W4, B4)

    x1 = packed[:B, _X1[0]:_X1[1]]
    x2 = packed[:B, _X2[0]:_X2[1]]
    x3 = packed[:B, _X3[0]:_X3[1]]
    out = packed[:B, _OUT[0]:_OUT[1]]
    return out, [x1, x2, x3]


def init_params(key):
    """Deterministic init mimicking torch.nn.Linear default U[-1/sqrt(in), 1/sqrt(in)].
    Weights stored transposed vs torch, i.e. (in_features, out_features)."""
    dims = [(8, 64), (64, 32), (32, 16), (16, 1)]
    params = {}
    keys = jax.random.split(key, 2 * len(dims))
    for i, (din, dout) in enumerate(dims):
        bound = 1.0 / jnp.sqrt(jnp.float32(din))
        params[f"w{i + 1}"] = jax.random.uniform(
            keys[2 * i], (din, dout), jnp.float32, -bound, bound)
        params[f"b{i + 1}"] = jax.random.uniform(
            keys[2 * i + 1], (1, dout), jnp.float32, -bound, bound)
    return params


if __name__ == "__main__":
    key = jax.random.PRNGKey(0)
    pkey, xkey = jax.random.split(key)
    params = init_params(pkey)

    B = 8  # small demo batch; input feature dim fixed at 8 by the module
    x = jax.random.normal(xkey, (B, 8), jnp.float32)

    out, hiddens = mainnet_forward(x, params)
    jax.block_until_ready(out)
    for h in hiddens:
        jax.block_until_ready(h)

    # Sanity check against plain-JAX reference of the PyTorch module.
    def ref(x, p):
        x1 = jax.nn.relu(x @ p["w1"] + p["b1"])
        x2 = jax.nn.relu(x1 @ p["w2"] + p["b2"])
        x3 = jax.nn.relu(x2 @ p["w3"] + p["b3"])
        return x3 @ p["w4"] + p["b4"], [x1, x2, x3]

    rout, rh = ref(x, params)
    assert out.shape == (B, 1)
    assert jnp.allclose(out, rout, atol=1e-5), "output mismatch"
    for a, b in zip(hiddens, rh):
        assert jnp.allclose(a, b, atol=1e-5), "hidden mismatch"

    print("KERNEL_OK")
</pallas_src>

<mosaic_0001>
module attributes {stable_mosaic.version = 11 : i64} {
  func.func @_mlp_packed_kernel(%arg0: i32, %arg1: memref<8x8xf32, #tpu.memory_space<vmem>>, %arg2: memref<8x128xf32, #tpu.memory_space<vmem>>, %arg3: memref<1x128xf32, #tpu.memory_space<vmem>>, %arg4: memref<128x128xf32, #tpu.memory_space<vmem>>, %arg5: memref<1x128xf32, #tpu.memory_space<vmem>>, %arg6: memref<128x128xf32, #tpu.memory_space<vmem>>, %arg7: memref<1x128xf32, #tpu.memory_space<vmem>>, %arg8: memref<128x128xf32, #tpu.memory_space<vmem>>, %arg9: memref<1x128xf32, #tpu.memory_space<vmem>>, %arg10: memref<8x128xf32, #tpu.memory_space<vmem>>) attributes {dimension_semantics = [#tpu.dimension_semantics<parallel>], iteration_bounds = array<i64: 1>, scalar_prefetch = 0 : i64, scratch_operands = 0 : i64, tpu.core_type = #tpu.core_type<tc>, window_params = [{transform_indices = @transform_0, window_bounds = array<i64: 8, 8>}, {pipeline_mode = #tpu.pipeline_mode<synchronous>, transform_indices = @transform_1, window_bounds = array<i64: 8, 128>}, {pipeline_mode = #tpu.pipeline_mode<synchronous>, transform_indices = @transform_2, window_bounds = array<i64: 1, 128>}, {pipeline_mode = #tpu.pipeline_mode<synchronous>, transform_indices = @transform_3, window_bounds = array<i64: 128, 128>}, {pipeline_mode = #tpu.pipeline_mode<synchronous>, transform_indices = @transform_4, window_bounds = array<i64: 1, 128>}, {pipeline_mode = #tpu.pipeline_mode<synchronous>, transform_indices = @transform_5, window_bounds = array<i64: 128, 128>}, {pipeline_mode = #tpu.pipeline_mode<synchronous>, transform_indices = @transform_6, window_bounds = array<i64: 1, 128>}, {pipeline_mode = #tpu.pipeline_mode<synchronous>, transform_indices = @transform_7, window_bounds = array<i64: 128, 128>}, {pipeline_mode = #tpu.pipeline_mode<synchronous>, transform_indices = @transform_8, window_bounds = array<i64: 1, 128>}, {transform_indices = @transform_9, window_bounds = array<i64: 8, 128>}]} {
    %c0 = arith.constant 0 : index
    %c0_0 = arith.constant 0 : index
    %0 = vector.load %arg1[%c0, %c0_0] : memref<8x8xf32, #tpu.memory_space<vmem>>, vector<8x8xf32>
    %c0_1 = arith.constant 0 : index
    %c0_2 = arith.constant 0 : index
    %1 = vector.load %arg2[%c0_1, %c0_2] : memref<8x128xf32, #tpu.memory_space<vmem>>, vector<8x128xf32>
    %cst = arith.constant dense<0.000000e+00> : vector<8x128xf32>
    %2 = tpu.matmul %0, %1, %cst {dimension_numbers = #tpu.dot_dimension_numbers<[1], [0], [0], [1], [0, 0, 1, 1], [], []>} : vector<8x8xf32>, vector<8x128xf32>, vector<8x128xf32> -> vector<8x128xf32>
    %c0_3 = arith.constant 0 : index
    %c0_4 = arith.constant 0 : index
    %3 = vector.load %arg3[%c0_3, %c0_4] : memref<1x128xf32, #tpu.memory_space<vmem>>, vector<1x128xf32>
    %4 = vector.broadcast %3 : vector<1x128xf32> to vector<8x128xf32>
    %5 = arith.addf %2, %4 : vector<8x128xf32>
    %cst_5 = arith.constant 0.000000e+00 : f32
    %6 = vector.broadcast %cst_5 : f32 to vector<8x128xf32>
    %7 = arith.maximumf %5, %6 : vector<8x128xf32>
    %c0_6 = arith.constant 0 : index
    %c0_7 = arith.constant 0 : index
    %8 = vector.load %arg4[%c0_6, %c0_7] : memref<128x128xf32, #tpu.memory_space<vmem>>, vector<128x128xf32>
    %cst_8 = arith.constant dense<0.000000e+00> : vector<8x128xf32>
    %9 = tpu.matmul %7, %8, %cst_8 {dimension_numbers = #tpu.dot_dimension_numbers<[1], [0], [0], [1], [0, 0, 1, 1], [], []>} : vector<8x128xf32>, vector<128x128xf32>, vector<8x128xf32> -> vector<8x128xf32>
    %c0_9 = arith.constant 0 : index
    %c0_10 = arith.constant 0 : index
    %10 = vector.load %arg5[%c0_9, %c0_10] : memref<1x128xf32, #tpu.memory_space<vmem>>, vector<1x128xf32>
    %11 = vector.broadcast %10 : vector<1x128xf32> to vector<8x128xf32>
    %12 = arith.addf %9, %11 : vector<8x128xf32>
    %cst_11 = arith.constant 0.000000e+00 : f32
    %13 = vector.broadcast %cst_11 : f32 to vector<8x128xf32>
    %14 = arith.maximumf %12, %13 : vector<8x128xf32>
    %15 = arith.addf %7, %14 : vector<8x128xf32>
    %c0_12 = arith.constant 0 : index
    %c0_13 = arith.constant 0 : index
    %16 = vector.load %arg6[%c0_12, %c0_13] : memref<128x128xf32, #tpu.memory_space<vmem>>, vector<128x128xf32>
    %cst_14 = arith.constant dense<0.000000e+00> : vector<8x128xf32>
    %17 = tpu.matmul %15, %16, %cst_14 {dimension_numbers = #tpu.dot_dimension_numbers<[1], [0], [0], [1], [0, 0, 1, 1], [], []>} : vector<8x128xf32>, vector<128x128xf32>, vector<8x128xf32> -> vector<8x128xf32>
    %c0_15 = arith.constant 0 : index
    %c0_16 = arith.constant 0 : index
    %18 = vector.load %arg7[%c0_15, %c0_16] : memref<1x128xf32, #tpu.memory_space<vmem>>, vector<1x128xf32>
    %19 = vector.broadcast %18 : vector<1x128xf32> to vector<8x128xf32>
    %20 = arith.addf %17, %19 : vector<8x128xf32>
    %cst_17 = arith.constant 0.000000e+00 : f32
    %21 = vector.broadcast %cst_17 : f32 to vector<8x128xf32>
    %22 = arith.maximumf %20, %21 : vector<8x128xf32>
    %23 = arith.addf %15, %22 : vector<8x128xf32>
    %c0_18 = arith.constant 0 : index
    %c0_19 = arith.constant 0 : index
    %24 = vector.load %arg8[%c0_18, %c0_19] : memref<128x128xf32, #tpu.memory_space<vmem>>, vector<128x128xf32>
    %cst_20 = arith.constant dense<0.000000e+00> : vector<8x128xf32>
    %25 = tpu.matmul %23, %24, %cst_20 {dimension_numbers = #tpu.dot_dimension_numbers<[1], [0], [0], [1], [0, 0, 1, 1], [], []>} : vector<8x128xf32>, vector<128x128xf32>, vector<8x128xf32> -> vector<8x128xf32>
    %26 = arith.addf %23, %25 : vector<8x128xf32>
    %c0_21 = arith.constant 0 : index
    %c0_22 = arith.constant 0 : index
    %27 = vector.load %arg9[%c0_21, %c0_22] : memref<1x128xf32, #tpu.memory_space<vmem>>, vector<1x128xf32>
    %28 = vector.broadcast %27 : vector<1x128xf32> to vector<8x128xf32>
    %29 = arith.addf %26, %28 : vector<8x128xf32>
    %c0_23 = arith.constant 0 : index
    %c0_24 = arith.constant 0 : index
    %30 = vector.load %arg10[%c0_23, %c0_24] : memref<8x128xf32, #tpu.memory_space<vmem>>, vector<8x128xf32>
    tpu.vector_store %arg10[%c0_23, %c0_24], %29 {strides = array<i32>} : memref<8x128xf32, #tpu.memory_space<vmem>>, vector<8x128xf32>,
    return
  }
  func.func @transform_0(%arg0: i32) -> (i32, i32) {
    %c0_i32 = arith.constant 0 : i32
    %c0_i32_0 = arith.constant 0 : i32
    return %arg0, %c0_i32 : i32, i32
  }
  func.func @transform_1(%arg0: i32) -> (i32, i32) {
    %c0_i32 = arith.constant 0 : i32
    %c0_i32_0 = arith.constant 0 : i32
    %c0_i32_1 = arith.constant 0 : i32
    return %c0_i32, %c0_i32_0 : i32, i32
  }
  func.func @transform_2(%arg0: i32) -> (i32, i32) {
    %c0_i32 = arith.constant 0 : i32
    %c0_i32_0 = arith.constant 0 : i32
    %c0_i32_1 = arith.constant 0 : i32
    return %c0_i32, %c0_i32_0 : i32, i32
  }
  func.func @transform_3(%arg0: i32) -> (i32, i32) {
    %c0_i32 = arith.constant 0 : i32
    %c0_i32_0 = arith.constant 0 : i32
    %c0_i32_1 = arith.constant 0 : i32
    return %c0_i32, %c0_i32_0 : i32, i32
  }
  func.func @transform_4(%arg0: i32) -> (i32, i32) {
    %c0_i32 = arith.constant 0 : i32
    %c0_i32_0 = arith.constant 0 : i32
    %c0_i32_1 = arith.constant 0 : i32
    return %c0_i32, %c0_i32_0 : i32, i32
  }
  func.func @transform_5(%arg0: i32) -> (i32, i32) {
    %c0_i32 = arith.constant 0 : i32
    %c0_i32_0 = arith.constant 0 : i32
    %c0_i32_1 = arith.constant 0 : i32
    return %c0_i32, %c0_i32_0 : i32, i32
  }
  func.func @transform_6(%arg0: i32) -> (i32, i32) {
    %c0_i32 = arith.constant 0 : i32
    %c0_i32_0 = arith.constant 0 : i32
    %c0_i32_1 = arith.constant 0 : i32
    return %c0_i32, %c0_i32_0 : i32, i32
  }
  func.func @transform_7(%arg0: i32) -> (i32, i32) {
    %c0_i32 = arith.constant 0 : i32
    %c0_i32_0 = arith.constant 0 : i32
    %c0_i32_1 = arith.constant 0 : i32
    return %c0_i32, %c0_i32_0 : i32, i32
  }
  func.func @transform_8(%arg0: i32) -> (i32, i32) {
    %c0_i32 = arith.constant 0 : i32
    %c0_i32_0 = arith.constant 0 : i32
    %c0_i32_1 = arith.constant 0 : i32
    return %c0_i32, %c0_i32_0 : i32, i32
  }
  func.func @transform_9(%arg0: i32) -> (i32, i32) {
    %c0_i32 = arith.constant 0 : i32
    %c0_i32_0 = arith.constant 0 : i32
    return %arg0, %c0_i32 : i32, i32
  }
}

</mosaic_0001>

<llo_original>
// kernel: tpu_custom_call.1
$region0: #{tpu_custom_call.1}
  #allocation0 [shape = 'u32[]', space=smem, size = 0x4, offset = 0x4, fixed_abs, tag = 'smem constant byte address 0x4 - core index']
  #allocation1 [shape = 'u32[144,128]{1,0:T(1,128)}', space=vmem, size = 0x12000, scoped, tag = 'internal scratch']
  %s0 = inlined_call_operand.hbm [shape: f32[8,8], index: 0, kind: input, shape index: {}]
  %s1 = inlined_call_operand.hbm [shape: f32[8,128], index: 1, kind: input, shape index: {}]
  %s2 = inlined_call_operand.vmem [shape: f32[1,128], index: 2, kind: input, shape index: {}]
  %s3 = inlined_call_operand.hbm [shape: f32[128,128], index: 3, kind: input, shape index: {}]
  %s4 = inlined_call_operand.vmem [shape: f32[1,128], index: 4, kind: input, shape index: {}]
  %s5 = inlined_call_operand.hbm [shape: f32[128,128], index: 5, kind: input, shape index: {}]
  %s6 = inlined_call_operand.vmem [shape: f32[1,128], index: 6, kind: input, shape index: {}]
  %s7 = inlined_call_operand.hbm [shape: f32[128,128], index: 7, kind: input, shape index: {}]
  %s8 = inlined_call_operand.vmem [shape: f32[1,128], index: 8, kind: input, shape index: {}]
  %s9 = inlined_call_operand.hbm [shape: f32[8,128], index: 9, kind: output, shape index: {}]
  %s10 = sld [smem:[#allocation0]]
  $region66: #{tpu_custom_call.1} parent=0
    _
  %s12 = ssub.s32 1, %s10
  %s13 = scalar_select 0, %s12, %s10
  $region1: #{tpu_custom_call.1} parent=0
    #allocation2 [shape = 'u8[4096]{0}', space=vmem, size = 0x1000, scoped, tag = 'input window, operand 0, single buffered']
    #allocation3 [shape = 's32[1]{0}', space=sflag, size = 0x4, scoped, tag = 'scoped memory for tpu_custom_call.1']
    #allocation4 [shape = 's32[1]{0}', space=sflag, size = 0x4, scoped, tag = 'scoped memory for tpu_custom_call.1']
    #allocation5 [shape = 'u8[4096]{0}', space=vmem, size = 0x1000, scoped, tag = 'input window, operand 1, single buffered']
    #allocation6 [shape = 's32[1]{0}', space=sflag, size = 0x4, scoped, tag = 'scoped memory for tpu_custom_call.1']
    #allocation7 [shape = 'u8[65536]{0}', space=vmem, size = 0x10000, scoped, tag = 'input window, operand 3, single buffered']
    #allocation8 [shape = 'u8[65536]{0}', space=vmem, size = 0x10000, scoped, tag = 'input window, operand 5, single buffered']
    #allocation9 [shape = 's32[1]{0}', space=sflag, size = 0x4, scoped, tag = 'scoped memory for tpu_custom_call.1']
    #allocation10 [shape = 'u8[65536]{0}', space=vmem, size = 0x10000, scoped, tag = 'input window, operand 7, single buffered']
    #allocation11 [shape = 'u8[4096]{0}', space=vmem, size = 0x1000, scoped, tag = 'output window, operand 0, single buffered']
    %14 = vsyncpa [#allocation3], 0
    %15 = vsyncpa [#allocation6], 0
    %16 = vsyncpa [#allocation9], 0
    %17 = vsyncpa [#allocation4], 0
    // Predicated region
    $region2: #{tpu_custom_call.1} parent=1 // pred_check
      _
    $region3: #{tpu_custom_call.1} parent=1 // pred_check_branch
      %19 = sbr.rel (0) target = $region5
    $region4: #{tpu_custom_call.1} parent=1 // pred_region
      %s21 = ssub.s32 128, 128
      %22 = vsyncadd [#allocation3], %s21
      %s24 = sshll.u32 [#allocation2], 4
      %s25 = int_to_ptr.vmem [resolvable:$true] %s24
      %27 = dma.hbm_to_vmem [thread:$0]  %s0, 128, %s25, [#allocation3]
    $region5: #{tpu_custom_call.1} parent=1 // pred_fallthru
      _
    // Predicated region
    $region6: #{tpu_custom_call.1} parent=1 // pred_check
      _
    $region7: #{tpu_custom_call.1} parent=1 // pred_check_branch
      %29 = sbr.rel (0) target = $region9
    $region8: #{tpu_custom_call.1} parent=1 // pred_region
      %s31 = ssub.s32 128, 128
      %32 = vsyncadd [#allocation6], %s31
      %s34 = sshll.u32 [#allocation5], 4
      %s35 = int_to_ptr.vmem [resolvable:$true] %s34
      %37 = dma.hbm_to_vmem [thread:$0]  %s1, 128, %s35, [#allocation6]
    $region9: #{tpu_custom_call.1} parent=1 // pred_fallthru
      _
    // Predicated region
    $region10: #{tpu_custom_call.1} parent=1 // pred_check
      _
    $region11: #{tpu_custom_call.1} parent=1 // pred_check_branch
      %39 = sbr.rel (0) target = $region13
    $region12: #{tpu_custom_call.1} parent=1 // pred_region
      _
    $region13: #{tpu_custom_call.1} parent=1 // pred_fallthru
      _
    // Predicated region
    $region14: #{tpu_custom_call.1} parent=1 // pred_check
      _
    $region15: #{tpu_custom_call.1} parent=1 // pred_check_branch
      %41 = sbr.rel (0) target = $region17
    $region16: #{tpu_custom_call.1} parent=1 // pred_region
      %s43 = ssub.s32 2048, 2048
      %44 = vsyncadd [#allocation6], %s43
      %s45 = sshll.u32 [#allocation7], 4
      %s46 = int_to_ptr.vmem [resolvable:$true] %s45
      %51 = dma.hbm_to_vmem [thread:$0]  %s3, 2048, %s46, [#allocation6], 128, 128, 8
    $region17: #{tpu_custom_call.1} parent=1 // pred_fallthru
      _
    // Predicated region
    $region18: #{tpu_custom_call.1} parent=1 // pred_check
      _
    $region19: #{tpu_custom_call.1} parent=1 // pred_check_branch
      %53 = sbr.rel (0) target = $region21
    $region20: #{tpu_custom_call.1} parent=1 // pred_region
      _
    $region21: #{tpu_custom_call.1} parent=1 // pred_fallthru
      _
    // Predicated region
    $region22: #{tpu_custom_call.1} parent=1 // pred_check
      _
    $region23: #{tpu_custom_call.1} parent=1 // pred_check_branch
      %55 = sbr.rel (0) target = $region25
    $region24: #{tpu_custom_call.1} parent=1 // pred_region
      %s57 = ssub.s32 2048, 2048
      %58 = vsyncadd [#allocation9], %s57
      %s59 = sshll.u32 [#allocation8], 4
      %s60 = int_to_ptr.vmem [resolvable:$true] %s59
      %65 = dma.hbm_to_vmem [thread:$0]  %s5, 2048, %s60, [#allocation9], 128, 128, 8
    $region25: #{tpu_custom_call.1} parent=1 // pred_fallthru
      _
    // Predicated region
    $region26: #{tpu_custom_call.1} parent=1 // pred_check
      _
    $region27: #{tpu_custom_call.1} parent=1 // pred_check_branch
      %67 = sbr.rel (0) target = $region29
    $region28: #{tpu_custom_call.1} parent=1 // pred_region
      _
    $region29: #{tpu_custom_call.1} parent=1 // pred_fallthru
      _
    // Predicated region
    $region30: #{tpu_custom_call.1} parent=1 // pred_check
      _
    $region31: #{tpu_custom_call.1} parent=1 // pred_check_branch
      %69 = sbr.rel (0) target = $region33
    $region32: #{tpu_custom_call.1} parent=1 // pred_region
      %s71 = ssub.s32 2048, 2048
      %72 = vsyncadd [#allocation9], %s71
      %s73 = sshll.u32 [#allocation10], 4
      %s74 = int_to_ptr.vmem [resolvable:$true] %s73
      %79 = dma.hbm_to_vmem [thread:$0]  %s7, 2048, %s74, [#allocation9], 128, 128, 8
    $region33: #{tpu_custom_call.1} parent=1 // pred_fallthru
      _
    // Predicated region
    $region34: #{tpu_custom_call.1} parent=1 // pred_check
      _
    $region35: #{tpu_custom_call.1} parent=1 // pred_check_branch
      %81 = sbr.rel (0) target = $region37
    $region36: #{tpu_custom_call.1} parent=1 // pred_region
      _
    $region37: #{tpu_custom_call.1} parent=1 // pred_fallthru
      _
    // Predicated region
    $region38: #{tpu_custom_call.1} parent=1 // pred_check
      _
    $region39: #{tpu_custom_call.1} parent=1 // pred_check_branch
      %83 = sbr.rel (0) target = $region41
    $region40: #{tpu_custom_call.1} parent=1 // pred_region
      %84 = dma.done [#allocation3], 128
    $region41: #{tpu_custom_call.1} parent=1 // pred_fallthru
      _
    // Predicated region
    $region42: #{tpu_custom_call.1} parent=1 // pred_check
      _
    $region43: #{tpu_custom_call.1} parent=1 // pred_check_branch
      %86 = sbr.rel (0) target = $region45
    $region44: #{tpu_custom_call.1} parent=1 // pred_region
      %87 = dma.done [#allocation6], 128
    $region45: #{tpu_custom_call.1} parent=1 // pred_fallthru
      _
    // Predicated region
    $region46: #{tpu_custom_call.1} parent=1 // pred_check
      _
    $region47: #{tpu_custom_call.1} parent=1 // pred_check_branch
      %89 = sbr.rel (0) target = $region49
    $region48: #{tpu_custom_call.1} parent=1 // pred_region
      %90 = dma.done [#allocation6], 2048
    $region49: #{tpu_custom_call.1} parent=1 // pred_fallthru
      _
    // Predicated region
    $region50: #{tpu_custom_call.1} parent=1 // pred_check
      _
    $region51: #{tpu_custom_call.1} parent=1 // pred_check_branch
      %92 = sbr.rel (0) target = $region53
    $region52: #{tpu_custom_call.1} parent=1 // pred_region
      %93 = dma.done [#allocation9], 2048
    $region53: #{tpu_custom_call.1} parent=1 // pred_fallthru
      _
    // Predicated region
    $region54: #{tpu_custom_call.1} parent=1 // pred_check
      _
    $region55: #{tpu_custom_call.1} parent=1 // pred_check_branch
      %95 = sbr.rel (0) target = $region57
    $region56: #{tpu_custom_call.1} parent=1 // pred_region
      %96 = dma.done [#allocation9], 2048
    $region57: #{tpu_custom_call.1} parent=1 // pred_fallthru
      _
    %v97 = vld [vmem:[#allocation2] sm:$0xff]
    %v98 = vld [vmem:[#allocation5] sm:$0xff]
    %v99 = vld [vmem:[%s2] sm:$0x1]
    %v101 = vlaneseq
    %v102 = vshrl.u32 %v101, 7
    %v103 = vsub.s32 0, %v102
    %v104 = vrot.slane %v99, %v103
    %vm106 = vcmask 64512
    %v108 = vsel %vm106, %v97, 0
    %110 = vmatprep.subr.mxu0 0.0
    %111 = vmatpush1.msra.mxu0 %v98
    %112 = vmatprep.subr.mxu0 0.0
    %113 = vmatpush1.msra.mxu0 0.0
    %114 = vmatprep.subr.mxu0 0.0
    %115 = vmatpush1.msra.mxu0 0.0
    %116 = vmatprep.subr.mxu0 0.0
    %117 = vmatpush1.msra.mxu0 0.0
    %118 = vmatprep.subr.mxu0 0.0
    %119 = vmatpush1.msra.mxu0 0.0
    %120 = vmatprep.subr.mxu0 0.0
    %121 = vmatpush1.msra.mxu0 0.0
    %122 = vmatprep.subr.mxu0 0.0
    %123 = vmatpush1.msra.mxu0 0.0
    %124 = vmatprep.subr.mxu0 0.0
    %125 = vmatpush1.msra.mxu0 0.0
    %126 = vmatprep.subr.mxu0 0.0
    %127 = vmatpush1.msra.mxu0 0.0
    %128 = vmatprep.subr.mxu0 0.0
    %129 = vmatpush1.msra.mxu0 0.0
    %130 = vmatprep.subr.mxu0 0.0
    %131 = vmatpush1.msra.mxu0 0.0
    %132 = vmatprep.subr.mxu0 0.0
    %133 = vmatpush1.msra.mxu0 0.0
    %134 = vmatprep.subr.mxu0 0.0
    %135 = vmatpush1.msra.mxu0 0.0
    %136 = vmatprep.subr.mxu0 0.0
    %137 = vmatpush1.msra.mxu0 0.0
    %138 = vmatprep.subr.mxu0 0.0
    %139 = vmatpush1.msra.mxu0 0.0
    %140 = vmatprep.subr.mxu0 0.0
    %141 = vmatpush1.msra.mxu0 0.0
    %142 = vmatprep.subr.mxu0 0.0
    %143 = vmatpush1.msra.mxu0 0.0
    %144 = vmatprep.subr.mxu0 0.0
    %145 = vmatpush1.msra.mxu0 0.0
    %146 = vmatprep.subr.mxu0 0.0
    %147 = vmatpush1.msra.mxu0 0.0
    %148 = vmatprep.subr.mxu0 0.0
    %149 = vmatpush1.msra.mxu0 0.0
    %150 = vmatprep.subr.mxu0 0.0
    %151 = vmatpush1.msra.mxu0 0.0
    %152 = vmatprep.subr.mxu0 0.0
    %153 = vmatpush1.msra.mxu0 0.0
    %154 = vmatprep.subr.mxu0 0.0
    %155 = vmatpush1.msra.mxu0 0.0
    %156 = vmatprep.subr.mxu0 0.0
    %157 = vmatpush1.msra.mxu0 0.0
    %158 = vmatprep.subr.mxu0 0.0
    %159 = vmatpush1.msra.mxu0 0.0
    %160 = vmatprep.subr.mxu0 0.0
    %161 = vmatpush1.msra.mxu0 0.0
    %162 = vmatprep.subr.mxu0 0.0
    %163 = vmatpush1.msra.mxu0 0.0
    %164 = vmatprep.subr.mxu0 0.0
    %165 = vmatpush1.msra.mxu0 0.0
    %166 = vmatprep.subr.mxu0 0.0
    %167 = vmatpush1.msra.mxu0 0.0
    %168 = vmatprep.subr.mxu0 0.0
    %169 = vmatpush1.msra.mxu0 0.0
    %170 = vmatprep.subr.mxu0 0.0
    %171 = vmatpush1.msra.mxu0 0.0
    %172 = vmatprep.subr.mxu0 0.0
    %173 = vmatpush1.msra.mxu0 0.0
    %174 = vmatprep.mubr.f32.mxu0 0.0
    %175 = vmatmul.mubr.f32.gmra.mrb[0].mxu0 %v108
    %v176 = vpop.f32.mrb[0].mxu0
    %v177 = vadd.f32 %v104, %v176
    %v178 = vpop.f32.mrb[0].mxu0
    %179 = vdwg.mxu0
    %v180 = vmax.f32 %v177, 0.0
    %v181 = vld [vmem:[#allocation7] sm:$0xff]
    %v182 = vld [vmem:[#allocation7 + $0x8] sm:$0xff]
    %v183 = vld [vmem:[#allocation7 + $0x10] sm:$0xff]
    %v184 = vld [vmem:[#allocation7 + $0x18] sm:$0xff]
    %v185 = vld [vmem:[#allocation7 + $0x20] sm:$0xff]
    %v186 = vld [vmem:[#allocation7 + $0x28] sm:$0xff]
    %v187 = vld [vmem:[#allocation7 + $0x30] sm:$0xff]
    %v188 = vld [vmem:[#allocation7 + $0x38] sm:$0xff]
    %v189 = vld [vmem:[#allocation7 + $0x40] sm:$0xff]
    %v190 = vld [vmem:[#allocation7 + $0x48] sm:$0xff]
    %v191 = vld [vmem:[#allocation7 + $0x50] sm:$0xff]
    %v192 = vld [vmem:[#allocation7 + $0x58] sm:$0xff]
    %v193 = vld [vmem:[#allocation7 + $0x60] sm:$0xff]
    %v194 = vld [vmem:[#allocation7 + $0x68] sm:$0xff]
    %v195 = vld [vmem:[#allocation7 + $0x70] sm:$0xff]
    %v196 = vld [vmem:[#allocation7 + $0x78] sm:$0xff]
    %v197 = vld [vmem:[%s4] sm:$0x1]
    %v199 = vlaneseq
    %v200 = vshrl.u32 %v199, 7
    %v201 = vsub.s32 0, %v200
    %v202 = vrot.slane %v197, %v201
    %204 = vmatprep.subr.mxu0 0.0
    %205 = vmatpush1.msra.mxu0 %v181
    %206 = vmatprep.subr.mxu0 0.0
    %207 = vmatpush1.msra.mxu0 %v182
    %208 = vmatprep.subr.mxu0 0.0
    %209 = vmatpush1.msra.mxu0 %v183
    %210 = vmatprep.subr.mxu0 0.0
    %211 = vmatpush1.msra.mxu0 %v184
    %212 = vmatprep.subr.mxu0 0.0
    %213 = vmatpush1.msra.mxu0 %v185
    %214 = vmatprep.subr.mxu0 0.0
    %215 = vmatpush1.msra.mxu0 %v186
    %216 = vmatprep.subr.mxu0 0.0
    %217 = vmatpush1.msra.mxu0 %v187
    %218 = vmatprep.subr.mxu0 0.0
    %219 = vmatpush1.msra.mxu0 %v188
    %220 = vmatprep.subr.mxu0 0.0
    %221 = vmatpush1.msra.mxu0 %v189
    %222 = vmatprep.subr.mxu0 0.0
    %223 = vmatpush1.msra.mxu0 %v190
    %224 = vmatprep.subr.mxu0 0.0
    %225 = vmatpush1.msra.mxu0 %v191
    %226 = vmatprep.subr.mxu0 0.0
    %227 = vmatpush1.msra.mxu0 %v192
    %228 = vmatprep.subr.mxu0 0.0
    %229 = vmatpush1.msra.mxu0 %v193
    %230 = vmatprep.subr.mxu0 0.0
    %231 = vmatpush1.msra.mxu0 %v194
    %232 = vmatprep.subr.mxu0 0.0
    %233 = vmatpush1.msra.mxu0 %v195
    %234 = vmatprep.subr.mxu0 0.0
    %235 = vmatpush1.msra.mxu0 %v196
    %236 = vmatprep.subr.mxu0 0.0
    %237 = vmatpush1.msra.mxu0 0.0
    %238 = vmatprep.subr.mxu0 0.0
    %239 = vmatpush1.msra.mxu0 0.0
    %240 = vmatprep.subr.mxu0 0.0
    %241 = vmatpush1.msra.mxu0 0.0
    %242 = vmatprep.subr.mxu0 0.0
    %243 = vmatpush1.msra.mxu0 0.0
    %244 = vmatprep.subr.mxu0 0.0
    %245 = vmatpush1.msra.mxu0 0.0
    %246 = vmatprep.subr.mxu0 0.0
    %247 = vmatpush1.msra.mxu0 0.0
    %248 = vmatprep.subr.mxu0 0.0
    %249 = vmatpush1.msra.mxu0 0.0
    %250 = vmatprep.subr.mxu0 0.0
    %251 = vmatpush1.msra.mxu0 0.0
    %252 = vmatprep.subr.mxu0 0.0
    %253 = vmatpush1.msra.mxu0 0.0
    %254 = vmatprep.subr.mxu0 0.0
    %255 = vmatpush1.msra.mxu0 0.0
    %256 = vmatprep.subr.mxu0 0.0
    %257 = vmatpush1.msra.mxu0 0.0
    %258 = vmatprep.subr.mxu0 0.0
    %259 = vmatpush1.msra.mxu0 0.0
    %260 = vmatprep.subr.mxu0 0.0
    %261 = vmatpush1.msra.mxu0 0.0
    %262 = vmatprep.subr.mxu0 0.0
    %263 = vmatpush1.msra.mxu0 0.0
    %264 = vmatprep.subr.mxu0 0.0
    %265 = vmatpush1.msra.mxu0 0.0
    %266 = vmatprep.subr.mxu0 0.0
    %267 = vmatpush1.msra.mxu0 0.0
    %268 = vmatprep.mubr.f32.mxu0 0.0
    %269 = vmatmul.mubr.f32.gmra.mrb[0].mxu0 %v180
    %v270 = vpop.f32.mrb[0].mxu0
    %v271 = vadd.f32 %v202, %v270
    %v272 = vpop.f32.mrb[0].mxu0
    %273 = vdwg.mxu0
    %v274 = vmax.f32 %v271, 0.0
    %v275 = vadd.f32 %v180, %v274
    %v276 = vld [vmem:[#allocation8] sm:$0xff]
    %v277 = vld [vmem:[#allocation8 + $0x8] sm:$0xff]
    %v278 = vld [vmem:[#allocation8 + $0x10] sm:$0xff]
    %v279 = vld [vmem:[#allocation8 + $0x18] sm:$0xff]
    %v280 = vld [vmem:[#allocation8 + $0x20] sm:$0xff]
    %v281 = vld [vmem:[#allocation8 + $0x28] sm:$0xff]
    %v282 = vld [vmem:[#allocation8 + $0x30] sm:$0xff]
    %v283 = vld [vmem:[#allocation8 + $0x38] sm:$0xff]
    %v284 = vld [vmem:[#allocation8 + $0x40] sm:$0xff]
    %v285 = vld [vmem:[#allocation8 + $0x48] sm:$0xff]
    %v286 = vld [vmem:[#allocation8 + $0x50] sm:$0xff]
    %v287 = vld [vmem:[#allocation8 + $0x58] sm:$0xff]
    %v288 = vld [vmem:[#allocation8 + $0x60] sm:$0xff]
    %v289 = vld [vmem:[#allocation8 + $0x68] sm:$0xff]
    %v290 = vld [vmem:[#allocation8 + $0x70] sm:$0xff]
    %v291 = vld [vmem:[#allocation8 + $0x78] sm:$0xff]
    %v292 = vld [vmem:[%s6] sm:$0x1]
    %v294 = vlaneseq
    %v295 = vshrl.u32 %v294, 7
    %v296 = vsub.s32 0, %v295
    %v297 = vrot.slane %v292, %v296
    %299 = vmatprep.subr.mxu0 0.0
    %300 = vmatpush1.msra.mxu0 %v276
    %301 = vmatprep.subr.mxu0 0.0
    %302 = vmatpush1.msra.mxu0 %v277
    %303 = vmatprep.subr.mxu0 0.0
    %304 = vmatpush1.msra.mxu0 %v278
    %305 = vmatprep.subr.mxu0 0.0
    %306 = vmatpush1.msra.mxu0 %v279
    %307 = vmatprep.subr.mxu0 0.0
    %308 = vmatpush1.msra.mxu0 %v280
    %309 = vmatprep.subr.mxu0 0.0
    %310 = vmatpush1.msra.mxu0 %v281
    %311 = vmatprep.subr.mxu0 0.0
    %312 = vmatpush1.msra.mxu0 %v282
    %313 = vmatprep.subr.mxu0 0.0
    %314 = vmatpush1.msra.mxu0 %v283
    %315 = vmatprep.subr.mxu0 0.0
    %316 = vmatpush1.msra.mxu0 %v284
    %317 = vmatprep.subr.mxu0 0.0
    %318 = vmatpush1.msra.mxu0 %v285
    %319 = vmatprep.subr.mxu0 0.0
    %320 = vmatpush1.msra.mxu0 %v286
    %321 = vmatprep.subr.mxu0 0.0
    %322 = vmatpush1.msra.mxu0 %v287
    %323 = vmatprep.subr.mxu0 0.0
    %324 = vmatpush1.msra.mxu0 %v288
    %325 = vmatprep.subr.mxu0 0.0
    %326 = vmatpush1.msra.mxu0 %v289
    %327 = vmatprep.subr.mxu0 0.0
    %328 = vmatpush1.msra.mxu0 %v290
    %329 = vmatprep.subr.mxu0 0.0
    %330 = vmatpush1.msra.mxu0 %v291
    %331 = vmatprep.subr.mxu0 0.0
    %332 = vmatpush1.msra.mxu0 0.0
    %333 = vmatprep.subr.mxu0 0.0
    %334 = vmatpush1.msra.mxu0 0.0
    %335 = vmatprep.subr.mxu0 0.0
    %336 = vmatpush1.msra.mxu0 0.0
    %337 = vmatprep.subr.mxu0 0.0
    %338 = vmatpush1.msra.mxu0 0.0
    %339 = vmatprep.subr.mxu0 0.0
    %340 = vmatpush1.msra.mxu0 0.0
    %341 = vmatprep.subr.mxu0 0.0
    %342 = vmatpush1.msra.mxu0 0.0
    %343 = vmatprep.subr.mxu0 0.0
    %344 = vmatpush1.msra.mxu0 0.0
    %345 = vmatprep.subr.mxu0 0.0
    %346 = vmatpush1.msra.mxu0 0.0
    %347 = vmatprep.subr.mxu0 0.0
    %348 = vmatpush1.msra.mxu0 0.0
    %349 = vmatprep.subr.mxu0 0.0
    %350 = vmatpush1.msra.mxu0 0.0
    %351 = vmatprep.subr.mxu0 0.0
    %352 = vmatpush1.msra.mxu0 0.0
    %353 = vmatprep.subr.mxu0 0.0
    %354 = vmatpush1.msra.mxu0 0.0
    %355 = vmatprep.subr.mxu0 0.0
    %356 = vmatpush1.msra.mxu0 0.0
    %357 = vmatprep.subr.mxu0 0.0
    %358 = vmatpush1.msra.mxu0 0.0
    %359 = vmatprep.subr.mxu0 0.0
    %360 = vmatpush1.msra.mxu0 0.0
    %361 = vmatprep.subr.mxu0 0.0
    %362 = vmatpush1.msra.mxu0 0.0
    %363 = vmatprep.mubr.f32.mxu0 0.0
    %364 = vmatmul.mubr.f32.gmra.mrb[0].mxu0 %v275
    %v365 = vpop.f32.mrb[0].mxu0
    %v366 = vadd.f32 %v297, %v365
    %v367 = vpop.f32.mrb[0].mxu0
    %368 = vdwg.mxu0
    %v369 = vmax.f32 %v366, 0.0
    %v370 = vadd.f32 %v275, %v369
    %v371 = vld [vmem:[#allocation10] sm:$0xff]
    %v372 = vld [vmem:[#allocation10 + $0x8] sm:$0xff]
    %v373 = vld [vmem:[#allocation10 + $0x10] sm:$0xff]
    %v374 = vld [vmem:[#allocation10 + $0x18] sm:$0xff]
    %v375 = vld [vmem:[#allocation10 + $0x20] sm:$0xff]
    %v376 = vld [vmem:[#allocation10 + $0x28] sm:$0xff]
    %v377 = vld [vmem:[#allocation10 + $0x30] sm:$0xff]
    %v378 = vld [vmem:[#allocation10 + $0x38] sm:$0xff]
    %v379 = vld [vmem:[#allocation10 + $0x40] sm:$0xff]
    %v380 = vld [vmem:[#allocation10 + $0x48] sm:$0xff]
    %v381 = vld [vmem:[#allocation10 + $0x50] sm:$0xff]
    %v382 = vld [vmem:[#allocation10 + $0x58] sm:$0xff]
    %v383 = vld [vmem:[#allocation10 + $0x60] sm:$0xff]
    %v384 = vld [vmem:[#allocation10 + $0x68] sm:$0xff]
    %v385 = vld [vmem:[#allocation10 + $0x70] sm:$0xff]
    %v386 = vld [vmem:[#allocation10 + $0x78] sm:$0xff]
    %387 = vmatprep.subr.mxu0 0.0
    %388 = vmatpush1.msra.mxu0 %v371
    %389 = vmatprep.subr.mxu0 0.0
    %390 = vmatpush1.msra.mxu0 %v372
    %391 = vmatprep.subr.mxu0 0.0
    %392 = vmatpush1.msra.mxu0 %v373
    %393 = vmatprep.subr.mxu0 0.0
    %394 = vmatpush1.msra.mxu0 %v374
    %395 = vmatprep.subr.mxu0 0.0
    %396 = vmatpush1.msra.mxu0 %v375
    %397 = vmatprep.subr.mxu0 0.0
    %398 = vmatpush1.msra.mxu0 %v376
    %399 = vmatprep.subr.mxu0 0.0
    %400 = vmatpush1.msra.mxu0 %v377
    %401 = vmatprep.subr.mxu0 0.0
    %402 = vmatpush1.msra.mxu0 %v378
    %403 = vmatprep.subr.mxu0 0.0
    %404 = vmatpush1.msra.mxu0 %v379
    %405 = vmatprep.subr.mxu0 0.0
    %406 = vmatpush1.msra.mxu0 %v380
    %407 = vmatprep.subr.mxu0 0.0
    %408 = vmatpush1.msra.mxu0 %v381
    %409 = vmatprep.subr.mxu0 0.0
    %410 = vmatpush1.msra.mxu0 %v382
    %411 = vmatprep.subr.mxu0 0.0
    %412 = vmatpush1.msra.mxu0 %v383
    %413 = vmatprep.subr.mxu0 0.0
    %414 = vmatpush1.msra.mxu0 %v384
    %415 = vmatprep.subr.mxu0 0.0
    %416 = vmatpush1.msra.mxu0 %v385
    %417 = vmatprep.subr.mxu0 0.0
    %418 = vmatpush1.msra.mxu0 %v386
    %419 = vmatprep.subr.mxu0 0.0
    %420 = vmatpush1.msra.mxu0 0.0
    %421 = vmatprep.subr.mxu0 0.0
    %422 = vmatpush1.msra.mxu0 0.0
    %423 = vmatprep.subr.mxu0 0.0
    %424 = vmatpush1.msra.mxu0 0.0
    %425 = vmatprep.subr.mxu0 0.0
    %426 = vmatpush1.msra.mxu0 0.0
    %427 = vmatprep.subr.mxu0 0.0
    %428 = vmatpush1.msra.mxu0 0.0
    %429 = vmatprep.subr.mxu0 0.0
    %430 = vmatpush1.msra.mxu0 0.0
    %431 = vmatprep.subr.mxu0 0.0
    %432 = vmatpush1.msra.mxu0 0.0
    %433 = vmatprep.subr.mxu0 0.0
    %434 = vmatpush1.msra.mxu0 0.0
    %435 = vmatprep.subr.mxu0 0.0
    %436 = vmatpush1.msra.mxu0 0.0
    %437 = vmatprep.subr.mxu0 0.0
    %438 = vmatpush1.msra.mxu0 0.0
    %439 = vmatprep.subr.mxu0 0.0
    %440 = vmatpush1.msra.mxu0 0.0
    %441 = vmatprep.subr.mxu0 0.0
    %442 = vmatpush1.msra.mxu0 0.0
    %443 = vmatprep.subr.mxu0 0.0
    %444 = vmatpush1.msra.mxu0 0.0
    %445 = vmatprep.subr.mxu0 0.0
    %446 = vmatpush1.msra.mxu0 0.0
    %447 = vmatprep.subr.mxu0 0.0
    %448 = vmatpush1.msra.mxu0 0.0
    %449 = vmatprep.subr.mxu0 0.0
    %450 = vmatpush1.msra.mxu0 0.0
    %451 = vmatprep.mubr.f32.mxu0 0.0
    %452 = vmatmul.mubr.f32.gmra.mrb[0].mxu0 %v370
    %v453 = vpop.f32.mrb[0].mxu0
    %v454 = vadd.f32 0.0, %v453
    %v455 = vpop.f32.mrb[0].mxu0
    %456 = vdwg.mxu0
    %v457 = vadd.f32 %v370, %v454
    %v458 = vld [vmem:[%s8] sm:$0x1]
    %v460 = vlaneseq
    %v461 = vshrl.u32 %v460, 7
    %v462 = vsub.s32 0, %v461
    %v463 = vrot.slane %v458, %v462
    %v465 = vadd.f32 %v457, %v463
    %466 = vst [vmem:[#allocation11] sm:$0xff] %v465
    // Predicated region
    $region58: #{tpu_custom_call.1} parent=1 // pred_check
      _
    $region59: #{tpu_custom_call.1} parent=1 // pred_check_branch
      %468 = sbr.rel (0) target = $region61
    $region60: #{tpu_custom_call.1} parent=1 // pred_region
      %s470 = ssub.s32 128, 128
      %471 = vsyncadd [#allocation4], %s470
      %s473 = sshll.u32 [#allocation11], 4
      %s474 = int_to_ptr.vmem [resolvable:$true] %s473
      %476 = dma.vmem_to_hbm [thread:$0]  %s474, 128, %s9, [#allocation4]
    $region61: #{tpu_custom_call.1} parent=1 // pred_fallthru
      _
    // Predicated region
    $region62: #{tpu_custom_call.1} parent=1 // pred_check
      _
    $region63: #{tpu_custom_call.1} parent=1 // pred_check_branch
      %478 = sbr.rel (0) target = $region65
    $region64: #{tpu_custom_call.1} parent=1 // pred_region
      %479 = dma.done [#allocation4], 128
    $region65: #{tpu_custom_call.1} parent=1 // pred_fallthru
      _
    %480 = vsyncpa [#allocation3], 1
    %481 = vsyncpa [#allocation6], 1
    %482 = vsyncpa [#allocation9], 1
    %483 = vsyncpa [#allocation4], 1

</llo_original>
